<compile_context>
chip_gen: v7x
topology: tpu7x:2x2x1
jax: 0.10.0
libtpu: 0.0.40
codegen_flags: <defaults>
</compile_context>

<pallas_src>
import functools
import math

import jax
import jax.numpy as jnp
from jax.experimental import pallas as pl
from jax.experimental.pallas import tpu as pltpu


def adain_kernel(x_ref, gamma_ref, beta_ref, o_ref, *, inv_n, inv_nm1, eps):
    x = x_ref[...].astype(jnp.float32)             # (bt, C, N)  -- N on lanes
    gamma = gamma_ref[...].astype(jnp.float32)     # (bt, C, 1)
    beta = beta_ref[...].astype(jnp.float32)       # (bt, C, 1)

    # One read of x: sum and sum-of-squares (lane reduces on the XLU).
    s1 = jnp.sum(x, axis=-1, keepdims=True)                  # (bt, C, 1)
    s2 = jnp.sum(x * x, axis=-1, keepdims=True)              # (bt, C, 1)
    mean = s1 * inv_n
    var = (s2 - s1 * mean) * inv_nm1                         # unbiased (N-1), torch default
    var = jnp.maximum(var, 0.0)                              # guard fp rounding
    scale = gamma * jax.lax.rsqrt(var + eps)                 # per-channel, EUP rsqrt
    shift = beta - mean * scale                              # fold mean into the bias
    o_ref[...] = (x * scale + shift).astype(o_ref.dtype)     # one FMA per element


def _pick_batch_tile(B, per_batch_bytes, budget_bytes=8 << 20):
    """Largest divisor of B whose double-buffered in+out block stays under budget."""
    bt = max(1, min(B, budget_bytes // max(per_batch_bytes, 1)))
    while B % bt != 0:
        bt -= 1
    return bt


def adaptive_instance_norm(x, style, w_orig, bias, eps=1e-9):
    """x: (B, N, C), style: (B, style_dim), w_orig: (2C, style_dim), bias: (2C,)."""
    B, N, C = x.shape
    style_dim = style.shape[1]

    # ---- Hoisted style linear (EqualLR scale folded into the style rows) ----
    lr_scale = math.sqrt(2.0 / style_dim)
    style_out = (style.astype(jnp.float32) * lr_scale) @ w_orig.astype(jnp.float32).T
    style_out = style_out + bias.astype(jnp.float32)               # (B, 2C)
    gamma = style_out[:, :C].reshape(B, C, 1)                      # (B, C, 1)
    beta = style_out[:, C:].reshape(B, C, 1)                       # (B, C, 1)

    # ---- Lane-dense layout: node axis N on the 128-lane axis ----
    x_t = jnp.transpose(x, (0, 2, 1))                              # (B, C, N)

    # ---- Batch packing within a VMEM budget ----
    itemsize = jnp.dtype(x.dtype).itemsize
    per_batch_bytes = 4 * C * N * itemsize      # in + out, each double-buffered
    bt = _pick_batch_tile(B, per_batch_bytes)

    inv_n = 1.0 / N
    # torch.var default is unbiased; N == 1 yields nan just like torch.
    inv_nm1 = 1.0 / (N - 1) if N > 1 else float("nan")

    kernel = functools.partial(adain_kernel, inv_n=inv_n, inv_nm1=inv_nm1, eps=eps)

    out_t = pl.pallas_call(
        kernel,
        out_shape=jax.ShapeDtypeStruct((B, C, N), x.dtype),
        grid=(B // bt,),
        in_specs=[
            pl.BlockSpec((bt, C, N), lambda b: (b, 0, 0)),         # per-batch-tile input
            pl.BlockSpec((bt, C, 1), lambda b: (b, 0, 0)),         # gamma column
            pl.BlockSpec((bt, C, 1), lambda b: (b, 0, 0)),         # beta column
        ],
        out_specs=pl.BlockSpec((bt, C, N), lambda b: (b, 0, 0)),
        compiler_params=pltpu.CompilerParams(
            dimension_semantics=("parallel",),
            vmem_limit_bytes=32 * 1024 * 1024,
        ),
    )(x_t, gamma, beta)

    return jnp.transpose(out_t, (0, 2, 1))                         # back to (B, N, C)


def reference(x, style, w_orig, bias, eps=1e-9):
    B, N, C = x.shape
    style_dim = style.shape[1]
    w = w_orig * math.sqrt(2.0 / style_dim)
    style_out = style @ w.T + bias                      # (B, 2C)
    gamma = style_out[:, None, :C]                      # (B, 1, C)
    beta = style_out[:, None, C:]                       # (B, 1, C)
    mean = jnp.mean(x, axis=1, keepdims=True)
    var = jnp.var(x, axis=1, keepdims=True, ddof=1)     # unbiased, like torch.var
    return gamma * (x - mean) / jnp.sqrt(var + eps) + beta


if __name__ == "__main__":
    B, N, C, style_dim = 2, 16, 4, 8

    key = jax.random.PRNGKey(0)
    k_x, k_s, k_w = jax.random.split(key, 3)

    x = jax.random.normal(k_x, (B, N, C), dtype=jnp.float32)
    style = jax.random.normal(k_s, (B, style_dim), dtype=jnp.float32)

    # Deterministic parameter init mirroring the module's __init__:
    #   linear.weight.data.normal_(); bias[:C] = 1; bias[C:] = 0
    w_orig = jax.random.normal(k_w, (2 * C, style_dim), dtype=jnp.float32)
    bias = jnp.concatenate(
        [jnp.ones((C,), jnp.float32), jnp.zeros((C,), jnp.float32)]
    )

    out = adaptive_instance_norm(x, style, w_orig, bias)
    out = jax.block_until_ready(out)

    ref = reference(x, style, w_orig, bias)
    assert out.shape == (B, N, C)
    assert jnp.allclose(out, ref, atol=1e-5, rtol=1e-5), "mismatch vs reference"

    print("KERNEL_OK")
</pallas_src>

<mosaic_0001>
module attributes {stable_mosaic.version = 11 : i64} {
  func.func @adain_kernel(%arg0: i32, %arg1: memref<2x4x16xf32, #tpu.memory_space<vmem>>, %arg2: memref<2x4x1xf32, #tpu.memory_space<vmem>>, %arg3: memref<2x4x1xf32, #tpu.memory_space<vmem>>, %arg4: memref<2x4x16xf32, #tpu.memory_space<vmem>>) attributes {dimension_semantics = [#tpu.dimension_semantics<parallel>], iteration_bounds = array<i64: 1>, scalar_prefetch = 0 : i64, scratch_operands = 0 : i64, tpu.core_type = #tpu.core_type<tc>, window_params = [{transform_indices = @transform_0, window_bounds = array<i64: 2, 4, 16>}, {transform_indices = @transform_1, window_bounds = array<i64: 2, 4, 1>}, {transform_indices = @transform_2, window_bounds = array<i64: 2, 4, 1>}, {transform_indices = @transform_3, window_bounds = array<i64: 2, 4, 16>}]} {
    %c0 = arith.constant 0 : index
    %c0_0 = arith.constant 0 : index
    %c0_1 = arith.constant 0 : index
    %0 = vector.load %arg1[%c0, %c0_0, %c0_1] : memref<2x4x16xf32, #tpu.memory_space<vmem>>, vector<2x4x16xf32>
    %c0_2 = arith.constant 0 : index
    %c0_3 = arith.constant 0 : index
    %c0_4 = arith.constant 0 : index
    %1 = vector.load %arg2[%c0_2, %c0_3, %c0_4] : memref<2x4x1xf32, #tpu.memory_space<vmem>>, vector<2x4x1xf32>
    %c0_5 = arith.constant 0 : index
    %c0_6 = arith.constant 0 : index
    %c0_7 = arith.constant 0 : index
    %2 = vector.load %arg3[%c0_5, %c0_6, %c0_7] : memref<2x4x1xf32, #tpu.memory_space<vmem>>, vector<2x4x1xf32>
    %cst = arith.constant dense<0.000000e+00> : vector<2x4xf32>
    %3 = vector.multi_reduction <add>, %0, %cst [2] : vector<2x4x16xf32> to vector<2x4xf32>
    %4 = vector.shape_cast %3 : vector<2x4xf32> to vector<2x4x1xf32>
    %5 = arith.mulf %0, %0 : vector<2x4x16xf32>
    %cst_8 = arith.constant dense<0.000000e+00> : vector<2x4xf32>
    %6 = vector.multi_reduction <add>, %5, %cst_8 [2] : vector<2x4x16xf32> to vector<2x4xf32>
    %7 = vector.shape_cast %6 : vector<2x4xf32> to vector<2x4x1xf32>
    %cst_9 = arith.constant 6.250000e-02 : f32
    %8 = vector.broadcast %cst_9 : f32 to vector<2x4x1xf32>
    %9 = arith.mulf %4, %8 : vector<2x4x1xf32>
    %10 = arith.mulf %4, %9 : vector<2x4x1xf32>
    %11 = arith.subf %7, %10 : vector<2x4x1xf32>
    %cst_10 = arith.constant 0.0666666701 : f32
    %12 = vector.broadcast %cst_10 : f32 to vector<2x4x1xf32>
    %13 = arith.mulf %11, %12 : vector<2x4x1xf32>
    %cst_11 = arith.constant 0.000000e+00 : f32
    %14 = vector.broadcast %cst_11 : f32 to vector<2x4x1xf32>
    %15 = arith.maximumf %13, %14 : vector<2x4x1xf32>
    %cst_12 = arith.constant 9.99999971E-10 : f32
    %16 = vector.broadcast %cst_12 : f32 to vector<2x4x1xf32>
    %17 = arith.addf %15, %16 : vector<2x4x1xf32>
    %18 = math.rsqrt %17 : vector<2x4x1xf32>
    %19 = arith.mulf %1, %18 : vector<2x4x1xf32>
    %20 = arith.mulf %9, %19 : vector<2x4x1xf32>
    %21 = arith.subf %2, %20 : vector<2x4x1xf32>
    %22 = vector.broadcast %19 : vector<2x4x1xf32> to vector<2x4x16xf32>
    %23 = arith.mulf %0, %22 : vector<2x4x16xf32>
    %24 = vector.broadcast %21 : vector<2x4x1xf32> to vector<2x4x16xf32>
    %25 = arith.addf %23, %24 : vector<2x4x16xf32>
    %c0_13 = arith.constant 0 : index
    %c0_14 = arith.constant 0 : index
    %c0_15 = arith.constant 0 : index
    %26 = vector.load %arg4[%c0_13, %c0_14, %c0_15] : memref<2x4x16xf32, #tpu.memory_space<vmem>>, vector<2x4x16xf32>
    tpu.vector_store %arg4[%c0_13, %c0_14, %c0_15], %25 {strides = array<i32>} : memref<2x4x16xf32, #tpu.memory_space<vmem>>, vector<2x4x16xf32>,
    return
  }
  func.func @transform_0(%arg0: i32) -> (i32, i32, i32) {
    %c0_i32 = arith.constant 0 : i32
    %c0_i32_0 = arith.constant 0 : i32
    %c0_i32_1 = arith.constant 0 : i32
    return %arg0, %c0_i32, %c0_i32_0 : i32, i32, i32
  }
  func.func @transform_1(%arg0: i32) -> (i32, i32, i32) {
    %c0_i32 = arith.constant 0 : i32
    %c0_i32_0 = arith.constant 0 : i32
    %c0_i32_1 = arith.constant 0 : i32
    return %arg0, %c0_i32, %c0_i32_0 : i32, i32, i32
  }
  func.func @transform_2(%arg0: i32) -> (i32, i32, i32) {
    %c0_i32 = arith.constant 0 : i32
    %c0_i32_0 = arith.constant 0 : i32
    %c0_i32_1 = arith.constant 0 : i32
    return %arg0, %c0_i32, %c0_i32_0 : i32, i32, i32
  }
  func.func @transform_3(%arg0: i32) -> (i32, i32, i32) {
    %c0_i32 = arith.constant 0 : i32
    %c0_i32_0 = arith.constant 0 : i32
    %c0_i32_1 = arith.constant 0 : i32
    return %arg0, %c0_i32, %c0_i32_0 : i32, i32, i32
  }
}

</mosaic_0001>

<llo_original>
// kernel: tpu_custom_call.1
$region0: #{tpu_custom_call.1}
  #allocation0 [shape = 'u32[]', space=smem, size = 0x4, offset = 0x4, fixed_abs, tag = 'smem constant byte address 0x4 - core index']
  #allocation1 [shape = 'u32[144,128]{1,0:T(1,128)}', space=vmem, size = 0x12000, scoped, tag = 'internal scratch']
  %s0 = inlined_call_operand.vmem [shape: f32[2,4,16], index: 0, kind: input, shape index: {}]
  %s1 = inlined_call_operand.vmem [shape: f32[2,4,1], index: 1, kind: input, shape index: {}]
  %s2 = inlined_call_operand.vmem [shape: f32[2,4,1], index: 2, kind: input, shape index: {}]
  %s3 = inlined_call_operand.hbm [shape: f32[2,4,16], index: 3, kind: output, shape index: {}]
  %s4 = sld [smem:[#allocation0]]
  $region22: #{tpu_custom_call.1} parent=0
    _
  %s6 = ssub.s32 1, %s4
  %s7 = scalar_select 0, %s6, %s4
  $region1: #{tpu_custom_call.1} parent=0
    #allocation2 [shape = 'u8[4096]{0}', space=vmem, size = 0x1000, scoped, tag = 'output window, operand 0, single buffered']
    #allocation3 [shape = 's32[1]{0}', space=sflag, size = 0x4, scoped, tag = 'scoped memory for tpu_custom_call.1']
    %8 = vsyncpa [#allocation3], 0
    // Predicated region
    $region2: #{tpu_custom_call.1} parent=1 // pred_check
      _
    $region3: #{tpu_custom_call.1} parent=1 // pred_check_branch
      %10 = sbr.rel (0) target = $region5
    $region4: #{tpu_custom_call.1} parent=1 // pred_region
      _
    $region5: #{tpu_custom_call.1} parent=1 // pred_fallthru
      _
    // Predicated region
    $region6: #{tpu_custom_call.1} parent=1 // pred_check
      _
    $region7: #{tpu_custom_call.1} parent=1 // pred_check_branch
      %12 = sbr.rel (0) target = $region9
    $region8: #{tpu_custom_call.1} parent=1 // pred_region
      _
    $region9: #{tpu_custom_call.1} parent=1 // pred_fallthru
      _
    // Predicated region
    $region10: #{tpu_custom_call.1} parent=1 // pred_check
      _
    $region11: #{tpu_custom_call.1} parent=1 // pred_check_branch
      %14 = sbr.rel (0) target = $region13
    $region12: #{tpu_custom_call.1} parent=1 // pred_region
      _
    $region13: #{tpu_custom_call.1} parent=1 // pred_fallthru
      _
    %v15 = vld [vmem:[%s0] sm:$0xf]
    %v16 = vld [vmem:[%s0 + $0x4] sm:$0xf]
    %v17 = vld [vmem:[%s1] sm:$0xf]
    %v18 = vld [vmem:[%s1 + $0x4] sm:$0xf]
    %v19 = vld [vmem:[%s2] sm:$0xf]
    %v20 = vld [vmem:[%s2 + $0x4] sm:$0xf]
    %vm21 = vcmask 125952
    %v22 = vsel %vm21, %v15, 0.0
    %23 = vadd.xlane.f32.xlu0 %v22
    %v24 = vpop.xlane.xlu0 %23
    %v25 = vsel %vm21, %v16, 0.0
    %26 = vadd.xlane.f32.xlu0 %v25
    %v27 = vpop.xlane.xlu0 %26
    %v28 = vmul.f32 %v15, %v15
    %v29 = vmul.f32 %v16, %v16
    %v30 = vsel %vm21, %v28, 0.0
    %31 = vadd.xlane.f32.xlu0 %v30
    %v32 = vpop.xlane.xlu0 %31
    %v33 = vsel %vm21, %v29, 0.0
    %34 = vadd.xlane.f32.xlu0 %v33
    %v35 = vpop.xlane.xlu0 %34
    %v36 = vmul.f32 %v24, 0.0625
    %v37 = vmul.f32 %v27, 0.0625
    %v38 = vmul.f32 %v24, %v36
    %v39 = vmul.f32 %v27, %v37
    %v40 = vsub.f32 %v32, %v38
    %v41 = vsub.f32 %v35, %v39
    %v42 = vmul.f32 %v40, 0.06666667
    %v43 = vmul.f32 %v41, 0.06666667
    %v44 = vmax.f32 %v42, 0.0
    %v45 = vmax.f32 %v43, 0.0
    %v46 = vadd.f32 %v44, 1e-09
    %v47 = vadd.f32 %v45, 1e-09
    %v48 = vrsqrt.pop %v46
    %v49 = vrsqrt.pop %v47
    %v50 = vmul.f32 %v17, %v48
    %v51 = vmul.f32 %v18, %v49
    %v52 = vmul.f32 %v36, %v50
    %v53 = vmul.f32 %v37, %v51
    %v54 = vsub.f32 %v19, %v52
    %v55 = vsub.f32 %v20, %v53
    %57 = vset.pattern.permute.xlu0 0
    %58 = vperm.xlu0 %57, %v50
    %v59 = vpop.permute.xlu0 %58
    %62 = vset.pattern.permute.xlu0 0
    %63 = vperm.xlu0 %62, %v51
    %v64 = vpop.permute.xlu0 %63
    %v66 = vmul.f32 %v15, %v59
    %v67 = vmul.f32 %v16, %v64
    %69 = vset.pattern.permute.xlu0 0
    %70 = vperm.xlu0 %69, %v54
    %v71 = vpop.permute.xlu0 %70
    %74 = vset.pattern.permute.xlu0 0
    %75 = vperm.xlu0 %74, %v55
    %v76 = vpop.permute.xlu0 %75
    %v78 = vadd.f32 %v66, %v71
    %v79 = vadd.f32 %v67, %v76
    %80 = vst.msk [vmem:[#allocation2] sm:$0xf] %vm21, %v78
    %81 = vst.msk [vmem:[#allocation2 + $0x4] sm:$0xf] %vm21, %v79
    // Predicated region
    $region14: #{tpu_custom_call.1} parent=1 // pred_check
      _
    $region15: #{tpu_custom_call.1} parent=1 // pred_check_branch
      %83 = sbr.rel (0) target = $region17
    $region16: #{tpu_custom_call.1} parent=1 // pred_region
      %s85 = ssub.s32 128, 128
      %86 = vsyncadd [#allocation3], %s85
      %s87 = sshll.u32 [#allocation2], 4
      %s88 = int_to_ptr.vmem [resolvable:$true] %s87
      %93 = dma.vmem_to_hbm [thread:$0]  %s88, 128, %s3, [#allocation3], 64, 64, 4
    $region17: #{tpu_custom_call.1} parent=1 // pred_fallthru
      _
    // Predicated region
    $region18: #{tpu_custom_call.1} parent=1 // pred_check
      _
    $region19: #{tpu_custom_call.1} parent=1 // pred_check_branch
      %95 = sbr.rel (0) target = $region21
    $region20: #{tpu_custom_call.1} parent=1 // pred_region
      %96 = dma.done [#allocation3], 128
    $region21: #{tpu_custom_call.1} parent=1 // pred_fallthru
      _
    %97 = vsyncpa [#allocation3], 1

</llo_original>
